<compile_context>
chip_gen: v6e
topology: v6e:2x2x1
jax: 0.10.0
libtpu: 0.0.40
codegen_flags: <defaults>
</compile_context>

<pallas_src>
import functools

import jax
import jax.numpy as jnp
from jax.experimental import pallas as pl
from jax.experimental.pallas import tpu as pltpu


_VMEM_LIMIT_BYTES = 48 * 1024 * 1024      # <= physical VMEM on v5e/v6e (128 MiB) and v7x (64 MiB)
_VMEM_ACT_BUDGET = 24 * 1024 * 1024       # headroom for weights / pipeline bookkeeping


# ------------------------------------------------------------------ Pallas kernel

def temporal_block_kernel(x_ref, w1_ref, w2_ref, wd_ref, b_ref, o_ref, *,
                          dilation, seg_len):
    """One grid step processes a (C, Bt*L) slab (Bt batch elements, time on lanes).

    x_ref : (Cin, Nt)            o_ref : (Cout, Nt)          Nt = Bt * seg_len
    w1_ref: (2, Cout, Cin)       w2_ref: (2, Cout, Cout)     wd_ref: (Cout, Cin)
    b_ref : (3, Cout, 1)         (b1, b2, b_downsample)
    """
    _, Nt = x_ref.shape
    d = dilation
    L = seg_len

    x = x_ref[...]

    # Per-segment causal mask: the lane roll wraps across batch segments (and the
    # block edge), but every wrapped lane lands at (t mod L) < d and is zeroed.
    t_idx = jax.lax.broadcasted_iota(jnp.int32, (1, Nt), 1)
    keep = (t_idx % L) >= d

    def shift_by_d(a):
        # a[:, t] -> a[:, t - d] within each length-L segment, zero for t_local < d.
        # Lane rotate on the XLU (near-free) + VPU select; no MXU work, no O(L^2) buffer.
        rolled = pltpu.roll(a, shift=d, axis=1)
        return jnp.where(keep, rolled, jnp.zeros_like(rolled))

    b1 = b_ref[0]
    b2 = b_ref[1]
    bd = b_ref[2]

    # ---- conv1 (causal dilated, K=2): W0 @ x[t-d] + W1 @ x[t] + b1, ReLU
    h1 = (jnp.dot(w1_ref[0], shift_by_d(x), preferred_element_type=jnp.float32)
          + jnp.dot(w1_ref[1], x, preferred_element_type=jnp.float32)
          + b1)
    h1 = jnp.maximum(h1, 0.0).astype(x.dtype)
    # TODO(synk): nn.Dropout is identity at inference; training-mode dropout not implemented.

    # ---- conv2 (causal dilated, K=2) + ReLU
    h2 = (jnp.dot(w2_ref[0], shift_by_d(h1), preferred_element_type=jnp.float32)
          + jnp.dot(w2_ref[1], h1, preferred_element_type=jnp.float32)
          + b2)
    h2 = jnp.maximum(h2, 0.0)

    # ---- downsample residual (1x1 conv) and final ReLU
    res = jnp.dot(wd_ref[...], x, preferred_element_type=jnp.float32) + bd
    o_ref[...] = jnp.maximum(h2 + res, 0.0).astype(o_ref.dtype)


# ------------------------------------------------------------------ tiling heuristic

def _pick_batch_tile(B, L, Cin, Cout, itemsize):
    """Pick Bt so the (C, Bt*L) activation blocks fit a VMEM budget, the lane dim
    Bt*L is layout-friendly (multiple of 128, or the full B*L), and the grid has
    >= 2 steps whenever possible (both TensorCores on v7x)."""
    # Rough per-lane-column footprint: double-buffered in/out blocks +
    # live f32 intermediates (shift(x), h1, shift(h1), h2, res).
    per_col = 2 * itemsize * (Cin + Cout) + 4 * (2 * Cin + 4 * Cout)
    max_cols = max(_VMEM_ACT_BUDGET // per_col, L)

    fitting, fallback = [], []
    for bt in range(1, B + 1):
        if B % bt:
            continue
        nt = bt * L
        if nt % 128 != 0 and bt != B:
            continue                              # keep blocks lane-dense / layout-legal
        (fitting if nt <= max_cols else fallback).append(bt)

    if fitting:
        # prefer >= 2 grid steps (megacore), then the largest tile
        return max(fitting, key=lambda bt: ((B // bt) >= 2, bt))
    return min(fallback)                          # everything over budget: smallest legal tile


# ------------------------------------------------------------------ wrapper

def temporal_block_forward(x_ncl, params, *, dilation, batch_tile=None,
                           compute_dtype=jnp.float32):
    """x_ncl: (B, Cin, L) (PyTorch NCL). Returns (B, Cout, L)."""
    B, Cin, L = x_ncl.shape
    w1, b1 = params["w1"], params["b1"]   # (Cout, Cin, 2), (Cout,)
    w2, b2 = params["w2"], params["b2"]   # (Cout, Cout, 2), (Cout,)
    wd, bd = params["wd"], params["bd"]   # (Cout, Cin, 1), (Cout,)
    Cout = w1.shape[0]

    # Stack the two conv taps on a leading axis: index 0 is the "t - dilation" tap.
    w1s = jnp.transpose(w1, (2, 0, 1)).astype(compute_dtype)          # (2, Cout, Cin)
    w2s = jnp.transpose(w2, (2, 0, 1)).astype(compute_dtype)          # (2, Cout, Cout)
    wd2 = wd[:, :, 0].astype(compute_dtype)                           # (Cout, Cin)
    biases = jnp.stack([b1, b2, bd], axis=0).reshape(3, Cout, 1).astype(jnp.float32)

    # Fold batch into the lane (time) axis: (B, Cin, L) -> (Cin, B*L).
    x2 = jnp.transpose(x_ncl.astype(compute_dtype), (1, 0, 2)).reshape(Cin, B * L)

    itemsize = jnp.dtype(compute_dtype).itemsize
    if batch_tile is None:
        batch_tile = _pick_batch_tile(B, L, Cin, Cout, itemsize)
    Bt = batch_tile
    assert B % Bt == 0
    Nt = Bt * L
    grid = (B // Bt,)

    flops = 2 * B * L * Cout * (2 * Cin + 2 * Cout + Cin)
    bytes_accessed = (itemsize * B * L * Cin + 4 * B * L * Cout
                      + itemsize * (2 * Cin * Cout + 2 * Cout * Cout + Cin * Cout)
                      + 4 * 3 * Cout)

    out2 = pl.pallas_call(
        functools.partial(temporal_block_kernel, dilation=dilation, seg_len=L),
        out_shape=jax.ShapeDtypeStruct((Cout, B * L), x_ncl.dtype),
        grid_spec=pltpu.PrefetchScalarGridSpec(
            num_scalar_prefetch=0,
            grid=grid,
            in_specs=[
                pl.BlockSpec((Cin, Nt), lambda i: (0, i)),
                pl.BlockSpec((2, Cout, Cin), lambda i: (0, 0, 0)),
                pl.BlockSpec((2, Cout, Cout), lambda i: (0, 0, 0)),
                pl.BlockSpec((Cout, Cin), lambda i: (0, 0)),
                pl.BlockSpec((3, Cout, 1), lambda i: (0, 0, 0)),
            ],
            out_specs=pl.BlockSpec((Cout, Nt), lambda i: (0, i)),
        ),
        compiler_params=pltpu.CompilerParams(
            dimension_semantics=("parallel",),
            vmem_limit_bytes=_VMEM_LIMIT_BYTES),
        cost_estimate=pl.CostEstimate(
            flops=flops, transcendentals=0, bytes_accessed=bytes_accessed),
    )(x2, w1s, w2s, wd2, biases)

    # (Cout, B*L) -> (B, Cout, L)
    return jnp.transpose(out2.reshape(Cout, B, L), (1, 0, 2))


# ------------------------------------------------------------------ pure-JAX reference

def reference_forward(x, w1, b1, w2, b2, wd, bd, *, dilation, padding):
    def conv1d(inp, w, b, dil, pad):
        dn = jax.lax.conv_dimension_numbers(inp.shape, w.shape, ("NCH", "OIH", "NCH"))
        y = jax.lax.conv_general_dilated(
            inp, w, window_strides=(1,), padding=[(pad, pad)],
            rhs_dilation=(dil,), dimension_numbers=dn)
        return y + b[None, :, None]

    h = conv1d(x, w1, b1, dilation, padding)[:, :, :-padding]   # chomp1
    h = jnp.maximum(h, 0.0)
    h = conv1d(h, w2, b2, dilation, padding)[:, :, :-padding]   # chomp2
    h = jnp.maximum(h, 0.0)
    res = conv1d(x, wd, bd, 1, 0)                               # 1x1 downsample
    return jnp.maximum(h + res, 0.0)


# ------------------------------------------------------------------ main

if __name__ == "__main__":
    B, Cin, Cout, L = 2, 4, 8, 16
    K, stride, dilation = 2, 1, 2
    padding = (K - 1) * dilation

    key = jax.random.PRNGKey(0)
    keys = jax.random.split(key, 10)

    # weight_norm parametrization: w = g * v / ||v||  (norm per output channel, dims 1..)
    def weight_norm(v, g):
        n = jnp.sqrt(jnp.sum(v * v, axis=(1, 2), keepdims=True))
        return g * v / n

    v1 = 0.1 * jax.random.normal(keys[0], (Cout, Cin, K), jnp.float32)
    g1 = 0.5 + jax.random.uniform(keys[1], (Cout, 1, 1), jnp.float32)
    b1 = 0.1 * jax.random.normal(keys[2], (Cout,), jnp.float32)

    v2 = 0.1 * jax.random.normal(keys[3], (Cout, Cout, K), jnp.float32)
    g2 = 0.5 + jax.random.uniform(keys[4], (Cout, 1, 1), jnp.float32)
    b2 = 0.1 * jax.random.normal(keys[5], (Cout,), jnp.float32)

    wd = 0.01 * jax.random.normal(keys[6], (Cout, Cin, 1), jnp.float32)
    bd = 0.1 * jax.random.normal(keys[7], (Cout,), jnp.float32)

    params = {
        "w1": weight_norm(v1, g1), "b1": b1,
        "w2": weight_norm(v2, g2), "b2": b2,
        "wd": wd, "bd": bd,
    }

    x = jax.random.normal(keys[8], (B, Cin, L), jnp.float32)     # NCL, PyTorch convention

    out = temporal_block_forward(x, params, dilation=dilation)
    out = jax.block_until_ready(out)

    ref = reference_forward(x, params["w1"], b1, params["w2"], b2, wd, bd,
                            dilation=dilation, padding=padding)
    ref = jax.block_until_ready(ref)

    assert out.shape == (B, Cout, L), out.shape
    assert jnp.allclose(out, ref, atol=1e-5, rtol=1e-5), \
        f"max abs err {jnp.max(jnp.abs(out - ref))}"

    print("KERNEL_OK")
</pallas_src>

<mosaic_0001>
module attributes {stable_mosaic.version = 11 : i64} {
  func.func @temporal_block_kernel(%arg0: i32, %arg1: memref<4x32xf32, #tpu.memory_space<vmem>>, %arg2: memref<2x8x4xf32, #tpu.memory_space<vmem>>, %arg3: memref<2x8x8xf32, #tpu.memory_space<vmem>>, %arg4: memref<8x4xf32, #tpu.memory_space<vmem>>, %arg5: memref<3x8x1xf32, #tpu.memory_space<vmem>>, %arg6: memref<8x32xf32, #tpu.memory_space<vmem>>) attributes {dimension_semantics = [#tpu.dimension_semantics<parallel>], iteration_bounds = array<i64: 1>, scalar_prefetch = 0 : i64, scratch_operands = 0 : i64, tpu.core_type = #tpu.core_type<tc>, window_params = [{transform_indices = @transform_0, window_bounds = array<i64: 4, 32>}, {pipeline_mode = #tpu.pipeline_mode<synchronous>, transform_indices = @transform_1, window_bounds = array<i64: 2, 8, 4>}, {pipeline_mode = #tpu.pipeline_mode<synchronous>, transform_indices = @transform_2, window_bounds = array<i64: 2, 8, 8>}, {pipeline_mode = #tpu.pipeline_mode<synchronous>, transform_indices = @transform_3, window_bounds = array<i64: 8, 4>}, {pipeline_mode = #tpu.pipeline_mode<synchronous>, transform_indices = @transform_4, window_bounds = array<i64: 3, 8, 1>}, {transform_indices = @transform_5, window_bounds = array<i64: 8, 32>}]} {
    %c0 = arith.constant 0 : index
    %c0_0 = arith.constant 0 : index
    %0 = vector.load %arg1[%c0, %c0_0] : memref<4x32xf32, #tpu.memory_space<vmem>>, vector<4x32xf32>
    %1 = tpu.iota {dimensions = array<i32: 1>} : vector<1x32xi32>
    %c16_i32 = arith.constant 16 : i32
    %c0_i32 = arith.constant 0 : i32
    %2 = arith.cmpi eq, %c16_i32, %c0_i32 : i32
    %c1_i32 = arith.constant 1 : i32
    %3 = arith.select %2, %c1_i32, %c16_i32 : i32
    %4 = vector.broadcast %3 : i32 to vector<1x32xi32>
    %5 = arith.remsi %1, %4 : vector<1x32xi32>
    %c0_i32_1 = arith.constant 0 : i32
    %6 = vector.broadcast %c0_i32_1 : i32 to vector<1x32xi32>
    %7 = arith.cmpi ne, %5, %6 : vector<1x32xi32>
    %c0_i32_2 = arith.constant 0 : i32
    %8 = vector.broadcast %c0_i32_2 : i32 to vector<1x32xi32>
    %9 = arith.cmpi slt, %5, %8 : vector<1x32xi32>
    %c0_i32_3 = arith.constant 0 : i32
    %10 = arith.cmpi slt, %3, %c0_i32_3 : i32
    %11 = vector.broadcast %10 : i1 to vector<1x32xi1>
    %12 = vector.broadcast %11 : vector<1x32xi1> to vector<1x32xi1>
    %13 = arith.xori %9, %12 : vector<1x32xi1>
    %14 = arith.andi %13, %7 : vector<1x32xi1>
    %15 = vector.broadcast %3 : i32 to vector<1x32xi32>
    %16 = arith.addi %5, %15 : vector<1x32xi32>
    %17 = arith.select %14, %16, %5 : vector<1x32xi1>, vector<1x32xi32>
    %c2_i32 = arith.constant 2 : i32
    %18 = vector.broadcast %c2_i32 : i32 to vector<1x32xi32>
    %19 = arith.cmpi sge, %17, %18 : vector<1x32xi32>
    %c0_4 = arith.constant 0 : index
    %c0_5 = arith.constant 0 : index
    %c0_6 = arith.constant 0 : index
    %20 = vector.load %arg5[%c0_4, %c0_5, %c0_6] : memref<3x8x1xf32, #tpu.memory_space<vmem>>, vector<1x8x1xf32>
    %21 = vector.shape_cast %20 : vector<1x8x1xf32> to vector<8x1xf32>
    %c1 = arith.constant 1 : index
    %c0_7 = arith.constant 0 : index
    %c0_8 = arith.constant 0 : index
    %22 = vector.load %arg5[%c1, %c0_7, %c0_8] : memref<3x8x1xf32, #tpu.memory_space<vmem>>, vector<1x8x1xf32>
    %23 = vector.shape_cast %22 : vector<1x8x1xf32> to vector<8x1xf32>
    %c2 = arith.constant 2 : index
    %c0_9 = arith.constant 0 : index
    %c0_10 = arith.constant 0 : index
    %24 = vector.load %arg5[%c2, %c0_9, %c0_10] : memref<3x8x1xf32, #tpu.memory_space<vmem>>, vector<1x8x1xf32>
    %25 = vector.shape_cast %24 : vector<1x8x1xf32> to vector<8x1xf32>
    %c0_11 = arith.constant 0 : index
    %c0_12 = arith.constant 0 : index
    %c0_13 = arith.constant 0 : index
    %26 = vector.load %arg2[%c0_11, %c0_12, %c0_13] : memref<2x8x4xf32, #tpu.memory_space<vmem>>, vector<1x8x4xf32>
    %27 = vector.shape_cast %26 : vector<1x8x4xf32> to vector<8x4xf32>
    %c2_i32_14 = arith.constant 2 : i32
    %28 = tpu.dynamic_rotate %0 by %c2_i32_14 dim 1 : vector<4x32xf32>, i32 -> vector<4x32xf32>
    %cst = arith.constant 0.000000e+00 : f32
    %29 = vector.broadcast %cst : f32 to vector<4x32xf32>
    %30 = vector.shape_cast %19 : vector<1x32xi1> to vector<1x32xi1>
    %31 = vector.broadcast %30 : vector<1x32xi1> to vector<4x32xi1>
    %32 = arith.select %31, %28, %29 : vector<4x32xi1>, vector<4x32xf32>
    %cst_15 = arith.constant dense<0.000000e+00> : vector<8x32xf32>
    %33 = tpu.matmul %27, %32, %cst_15 {dimension_numbers = #tpu.dot_dimension_numbers<[1], [0], [0], [1], [0, 0, 1, 1], [], []>} : vector<8x4xf32>, vector<4x32xf32>, vector<8x32xf32> -> vector<8x32xf32>
    %c1_16 = arith.constant 1 : index
    %c0_17 = arith.constant 0 : index
    %c0_18 = arith.constant 0 : index
    %34 = vector.load %arg2[%c1_16, %c0_17, %c0_18] : memref<2x8x4xf32, #tpu.memory_space<vmem>>, vector<1x8x4xf32>
    %35 = vector.shape_cast %34 : vector<1x8x4xf32> to vector<8x4xf32>
    %cst_19 = arith.constant dense<0.000000e+00> : vector<8x32xf32>
    %36 = tpu.matmul %35, %0, %cst_19 {dimension_numbers = #tpu.dot_dimension_numbers<[1], [0], [0], [1], [0, 0, 1, 1], [], []>} : vector<8x4xf32>, vector<4x32xf32>, vector<8x32xf32> -> vector<8x32xf32>
    %37 = arith.addf %33, %36 : vector<8x32xf32>
    %38 = vector.broadcast %21 : vector<8x1xf32> to vector<8x32xf32>
    %39 = arith.addf %37, %38 : vector<8x32xf32>
    %cst_20 = arith.constant 0.000000e+00 : f32
    %40 = vector.broadcast %cst_20 : f32 to vector<8x32xf32>
    %41 = arith.maximumf %39, %40 : vector<8x32xf32>
    %c0_21 = arith.constant 0 : index
    %c0_22 = arith.constant 0 : index
    %c0_23 = arith.constant 0 : index
    %42 = vector.load %arg3[%c0_21, %c0_22, %c0_23] : memref<2x8x8xf32, #tpu.memory_space<vmem>>, vector<1x8x8xf32>
    %43 = vector.shape_cast %42 : vector<1x8x8xf32> to vector<8x8xf32>
    %c2_i32_24 = arith.constant 2 : i32
    %44 = tpu.dynamic_rotate %41 by %c2_i32_24 dim 1 : vector<8x32xf32>, i32 -> vector<8x32xf32>
    %cst_25 = arith.constant 0.000000e+00 : f32
    %45 = vector.broadcast %cst_25 : f32 to vector<8x32xf32>
    %46 = vector.shape_cast %19 : vector<1x32xi1> to vector<1x32xi1>
    %47 = vector.broadcast %46 : vector<1x32xi1> to vector<8x32xi1>
    %48 = arith.select %47, %44, %45 : vector<8x32xi1>, vector<8x32xf32>
    %cst_26 = arith.constant dense<0.000000e+00> : vector<8x32xf32>
    %49 = tpu.matmul %43, %48, %cst_26 {dimension_numbers = #tpu.dot_dimension_numbers<[1], [0], [0], [1], [0, 0, 1, 1], [], []>} : vector<8x8xf32>, vector<8x32xf32>, vector<8x32xf32> -> vector<8x32xf32>
    %c1_27 = arith.constant 1 : index
    %c0_28 = arith.constant 0 : index
    %c0_29 = arith.constant 0 : index
    %50 = vector.load %arg3[%c1_27, %c0_28, %c0_29] : memref<2x8x8xf32, #tpu.memory_space<vmem>>, vector<1x8x8xf32>
    %51 = vector.shape_cast %50 : vector<1x8x8xf32> to vector<8x8xf32>
    %cst_30 = arith.constant dense<0.000000e+00> : vector<8x32xf32>
    %52 = tpu.matmul %51, %41, %cst_30 {dimension_numbers = #tpu.dot_dimension_numbers<[1], [0], [0], [1], [0, 0, 1, 1], [], []>} : vector<8x8xf32>, vector<8x32xf32>, vector<8x32xf32> -> vector<8x32xf32>
    %53 = arith.addf %49, %52 : vector<8x32xf32>
    %54 = vector.broadcast %23 : vector<8x1xf32> to vector<8x32xf32>
    %55 = arith.addf %53, %54 : vector<8x32xf32>
    %cst_31 = arith.constant 0.000000e+00 : f32
    %56 = vector.broadcast %cst_31 : f32 to vector<8x32xf32>
    %57 = arith.maximumf %55, %56 : vector<8x32xf32>
    %c0_32 = arith.constant 0 : index
    %c0_33 = arith.constant 0 : index
    %58 = vector.load %arg4[%c0_32, %c0_33] : memref<8x4xf32, #tpu.memory_space<vmem>>, vector<8x4xf32>
    %cst_34 = arith.constant dense<0.000000e+00> : vector<8x32xf32>
    %59 = tpu.matmul %58, %0, %cst_34 {dimension_numbers = #tpu.dot_dimension_numbers<[1], [0], [0], [1], [0, 0, 1, 1], [], []>} : vector<8x4xf32>, vector<4x32xf32>, vector<8x32xf32> -> vector<8x32xf32>
    %60 = vector.broadcast %25 : vector<8x1xf32> to vector<8x32xf32>
    %61 = arith.addf %59, %60 : vector<8x32xf32>
    %62 = arith.addf %57, %61 : vector<8x32xf32>
    %cst_35 = arith.constant 0.000000e+00 : f32
    %63 = vector.broadcast %cst_35 : f32 to vector<8x32xf32>
    %64 = arith.maximumf %62, %63 : vector<8x32xf32>
    %c0_36 = arith.constant 0 : index
    %c0_37 = arith.constant 0 : index
    %65 = vector.load %arg6[%c0_36, %c0_37] : memref<8x32xf32, #tpu.memory_space<vmem>>, vector<8x32xf32>
    tpu.vector_store %arg6[%c0_36, %c0_37], %64 {strides = array<i32>} : memref<8x32xf32, #tpu.memory_space<vmem>>, vector<8x32xf32>,
    return
  }
  func.func @transform_0(%arg0: i32) -> (i32, i32) {
    %c0_i32 = arith.constant 0 : i32
    %c0_i32_0 = arith.constant 0 : i32
    return %c0_i32, %arg0 : i32, i32
  }
  func.func @transform_1(%arg0: i32) -> (i32, i32, i32) {
    %c0_i32 = arith.constant 0 : i32
    %c0_i32_0 = arith.constant 0 : i32
    %c0_i32_1 = arith.constant 0 : i32
    %c0_i32_2 = arith.constant 0 : i32
    return %c0_i32, %c0_i32_0, %c0_i32_1 : i32, i32, i32
  }
  func.func @transform_2(%arg0: i32) -> (i32, i32, i32) {
    %c0_i32 = arith.constant 0 : i32
    %c0_i32_0 = arith.constant 0 : i32
    %c0_i32_1 = arith.constant 0 : i32
    %c0_i32_2 = arith.constant 0 : i32
    return %c0_i32, %c0_i32_0, %c0_i32_1 : i32, i32, i32
  }
  func.func @transform_3(%arg0: i32) -> (i32, i32) {
    %c0_i32 = arith.constant 0 : i32
    %c0_i32_0 = arith.constant 0 : i32
    %c0_i32_1 = arith.constant 0 : i32
    return %c0_i32, %c0_i32_0 : i32, i32
  }
  func.func @transform_4(%arg0: i32) -> (i32, i32, i32) {
    %c0_i32 = arith.constant 0 : i32
    %c0_i32_0 = arith.constant 0 : i32
    %c0_i32_1 = arith.constant 0 : i32
    %c0_i32_2 = arith.constant 0 : i32
    return %c0_i32, %c0_i32_0, %c0_i32_1 : i32, i32, i32
  }
  func.func @transform_5(%arg0: i32) -> (i32, i32) {
    %c0_i32 = arith.constant 0 : i32
    %c0_i32_0 = arith.constant 0 : i32
    return %c0_i32, %arg0 : i32, i32
  }
}

</mosaic_0001>

<llo_original>
// kernel: tpu_custom_call.1
$region0: #{tpu_custom_call.1}
  #allocation0 [shape = 'u32[]', space=smem, size = 0x4, offset = 0x4, fixed_abs, tag = 'smem constant byte address 0x4 - core index']
  #allocation1 [shape = 'u32[144,128]{1,0:T(1,128)}', space=vmem, size = 0x12000, scoped, tag = 'internal scratch']
  %s0 = inlined_call_operand.vmem [shape: f32[4,32], index: 0, kind: input, shape index: {}]
  %s1 = inlined_call_operand.vmem [shape: f32[2,8,4], index: 1, kind: input, shape index: {}]
  %s2 = inlined_call_operand.vmem [shape: f32[2,8,8], index: 2, kind: input, shape index: {}]
  %s3 = inlined_call_operand.vmem [shape: f32[8,4], index: 3, kind: input, shape index: {}]
  %s4 = inlined_call_operand.vmem [shape: f32[3,8,1], index: 4, kind: input, shape index: {}]
  %s5 = inlined_call_operand.hbm [shape: f32[8,32], index: 5, kind: output, shape index: {}]
  %s6 = sld [smem:[#allocation0]]
  $region30: #{tpu_custom_call.1} parent=0
    _
  %s8 = ssub.s32 1, %s6
  %s9 = scalar_select 0, %s8, %s6
  $region1: #{tpu_custom_call.1} parent=0
    #allocation2 [shape = 'u8[4096]{0}', space=vmem, size = 0x1000, scoped, tag = 'output window, operand 0, single buffered']
    #allocation3 [shape = 's32[1]{0}', space=sflag, size = 0x4, scoped, tag = 'scoped memory for tpu_custom_call.1']
    %10 = vsyncpa [#allocation3], 0
    // Predicated region
    $region2: #{tpu_custom_call.1} parent=1 // pred_check
      _
    $region3: #{tpu_custom_call.1} parent=1 // pred_check_branch
      %12 = sbr.rel (0) target = $region5
    $region4: #{tpu_custom_call.1} parent=1 // pred_region
      _
    $region5: #{tpu_custom_call.1} parent=1 // pred_fallthru
      _
    // Predicated region
    $region6: #{tpu_custom_call.1} parent=1 // pred_check
      _
    $region7: #{tpu_custom_call.1} parent=1 // pred_check_branch
      %14 = sbr.rel (0) target = $region9
    $region8: #{tpu_custom_call.1} parent=1 // pred_region
      _
    $region9: #{tpu_custom_call.1} parent=1 // pred_fallthru
      _
    // Predicated region
    $region10: #{tpu_custom_call.1} parent=1 // pred_check
      _
    $region11: #{tpu_custom_call.1} parent=1 // pred_check_branch
      %16 = sbr.rel (0) target = $region13
    $region12: #{tpu_custom_call.1} parent=1 // pred_region
      _
    $region13: #{tpu_custom_call.1} parent=1 // pred_fallthru
      _
    // Predicated region
    $region14: #{tpu_custom_call.1} parent=1 // pred_check
      _
    $region15: #{tpu_custom_call.1} parent=1 // pred_check_branch
      %18 = sbr.rel (0) target = $region17
    $region16: #{tpu_custom_call.1} parent=1 // pred_region
      _
    $region17: #{tpu_custom_call.1} parent=1 // pred_fallthru
      _
    // Predicated region
    $region18: #{tpu_custom_call.1} parent=1 // pred_check
      _
    $region19: #{tpu_custom_call.1} parent=1 // pred_check_branch
      %20 = sbr.rel (0) target = $region21
    $region20: #{tpu_custom_call.1} parent=1 // pred_region
      _
    $region21: #{tpu_custom_call.1} parent=1 // pred_fallthru
      _
    %v21 = vld [vmem:[%s0] sm:$0xf]
    %v22 = vlaneseq
    %v23 = vand.u32 %v22, 127
    %vm24 = vcmp.lt.s32.totalorder %v23, 0
    %v25 = vsub.s32 0, %v23
    %v26 = vsel %vm24, %v25, %v23
    %v27 = vshrl.u32 %v26, 4
    %v28 = vand.u32 %v26, 15
    %v29 = vsub.s32 0, %v28
    %v30 = vsel %vm24, %v29, %v28
    %vm31 = vcmp.ne.s32.totalorder %v30, 0
    %vm32 = vcmp.lt.s32.totalorder %v30, 0
    %vm33 = vmand %vm32, %vm31
    %v34 = vadd.s32 %v30, 16
    %v35 = vsel %vm33, %v34, %v30
    %vm36 = vcmp.ge.s32.totalorder %v35, 2
    %v37 = vld [vmem:[%s4] sm:$0xff]
    %s38 = scalar_lea.vmem %s4, 8
    %v39 = vld [vmem:[%s38] sm:$0xff]
    %s40 = scalar_lea.vmem %s4, 16
    %v41 = vld [vmem:[%s40] sm:$0xff]
    %v42 = vld [vmem:[%s1] sm:$0xff]
    %vm43 = vcmask 1047808
    %44 = vrot.lane.b32.xlu0 %v21, 32
    %v45 = vpop.permute.xlu0 %44
    %v46 = vsel %vm43, %v45, %v21
    %47 = vrot.lane.b32.xlu0 %v46, 32
    %v48 = vpop.permute.xlu0 %47
    %v49 = vsel %vm43, %v48, %v21
    %v50 = vsel %vm36, 1, 0
    %vm51 = vcmp.eq.s32.totalorder %v50, 1
    %53 = vrot.lane.b32.xlu0 %v49, 98
    %v54 = vpop.permute.xlu0 %53
    %v56 = vsel %vm51, %v54, 0.0
    %s57 = scalar_lea.vmem %s1, 8
    %v58 = vld [vmem:[%s57] sm:$0xff]
    %vm59 = vcmask 31744
    %v61 = vsel %vm59, %v58, 0
    %vm63 = vcmask 1043456
    %v65 = vsel %vm63, %v21, 0
    %67 = vmatprep.subr.mxu0 0.0
    %68 = vmatpush1.msra.mxu0 0.0
    %69 = vmatprep.subr.mxu0 0.0
    %70 = vmatpush1.msra.mxu0 0.0
    %71 = vmatprep.subr.mxu0 0.0
    %72 = vmatpush1.msra.mxu0 0.0
    %73 = vmatprep.subr.mxu0 0.0
    %74 = vmatpush1.msra.mxu0 0.0
    %75 = vmatprep.subr.mxu0 0.0
    %76 = vmatpush1.msra.mxu0 0.0
    %77 = vmatprep.subr.mxu0 0.0
    %78 = vmatpush1.msra.mxu0 0.0
    %79 = vmatprep.subr.mxu0 0.0
    %80 = vmatpush1.msra.mxu0 0.0
    %81 = vmatprep.subr.mxu0 0.0
    %82 = vmatpush1.msra.mxu0 0.0
    %83 = vmatprep.subr.mxu0 0.0
    %84 = vmatpush1.msra.mxu0 0.0
    %85 = vmatprep.subr.mxu0 0.0
    %86 = vmatpush1.msra.mxu0 0.0
    %87 = vmatprep.subr.mxu0 0.0
    %88 = vmatpush1.msra.mxu0 0.0
    %89 = vmatprep.subr.mxu0 0.0
    %90 = vmatpush1.msra.mxu0 0.0
    %91 = vmatprep.subr.mxu0 0.0
    %92 = vmatpush1.msra.mxu0 0.0
    %93 = vmatprep.subr.mxu0 0.0
    %94 = vmatpush1.msra.mxu0 0.0
    %95 = vmatprep.subr.mxu0 0.0
    %96 = vmatpush1.msra.mxu0 0.0
    %97 = vmatprep.subr.mxu0 0.0
    %98 = vmatpush1.msra.mxu0 %v65
    %99 = vmatprep.subr.mxu0 0.0
    %100 = vmatpush2.msra.mxu0 0.0
    %101 = vmatprep.subr.mxu0 0.0
    %102 = vmatpush2.msra.mxu0 0.0
    %103 = vmatprep.subr.mxu0 0.0
    %104 = vmatpush2.msra.mxu0 0.0
    %105 = vmatprep.subr.mxu0 0.0
    %106 = vmatpush2.msra.mxu0 0.0
    %107 = vmatprep.subr.mxu0 0.0
    %108 = vmatpush2.msra.mxu0 0.0
    %109 = vmatprep.subr.mxu0 0.0
    %110 = vmatpush2.msra.mxu0 0.0
    %111 = vmatprep.subr.mxu0 0.0
    %112 = vmatpush2.msra.mxu0 0.0
    %113 = vmatprep.subr.mxu0 0.0
    %114 = vmatpush2.msra.mxu0 0.0
    %115 = vmatprep.subr.mxu0 0.0
    %116 = vmatpush2.msra.mxu0 0.0
    %117 = vmatprep.subr.mxu0 0.0
    %118 = vmatpush2.msra.mxu0 0.0
    %119 = vmatprep.subr.mxu0 0.0
    %120 = vmatpush2.msra.mxu0 0.0
    %121 = vmatprep.subr.mxu0 0.0
    %122 = vmatpush2.msra.mxu0 0.0
    %123 = vmatprep.subr.mxu0 0.0
    %124 = vmatpush2.msra.mxu0 0.0
    %125 = vmatprep.subr.mxu0 0.0
    %126 = vmatpush2.msra.mxu0 0.0
    %127 = vmatprep.subr.mxu0 0.0
    %128 = vmatpush2.msra.mxu0 0.0
    %129 = vmatprep.subr.mxu0 0.0
    %130 = vmatpush2.msra.mxu0 0.0
    %131 = vmatprep.mubr.f32.mxu0 0.0
    %132 = vmatmul.mubr.f32.gmra.mxu0 %v61
    %v133 = vpop.f32.mrf.mxu0
    %v134 = vadd.f32 0.0, %v133
    %v135 = vpop.f32.mrf.mxu0
    %136 = vdwg.mxu0
    %v138 = vsel %vm59, %v42, 0
    %v141 = vsel %vm63, %v56, 0
    %143 = vmatprep.subr.mxu0 0.0
    %144 = vmatpush1.msra.mxu0 0.0
    %145 = vmatprep.subr.mxu0 0.0
    %146 = vmatpush1.msra.mxu0 0.0
    %147 = vmatprep.subr.mxu0 0.0
    %148 = vmatpush1.msra.mxu0 0.0
    %149 = vmatprep.subr.mxu0 0.0
    %150 = vmatpush1.msra.mxu0 0.0
    %151 = vmatprep.subr.mxu0 0.0
    %152 = vmatpush1.msra.mxu0 0.0
    %153 = vmatprep.subr.mxu0 0.0
    %154 = vmatpush1.msra.mxu0 0.0
    %155 = vmatprep.subr.mxu0 0.0
    %156 = vmatpush1.msra.mxu0 0.0
    %157 = vmatprep.subr.mxu0 0.0
    %158 = vmatpush1.msra.mxu0 0.0
    %159 = vmatprep.subr.mxu0 0.0
    %160 = vmatpush1.msra.mxu0 0.0
    %161 = vmatprep.subr.mxu0 0.0
    %162 = vmatpush1.msra.mxu0 0.0
    %163 = vmatprep.subr.mxu0 0.0
    %164 = vmatpush1.msra.mxu0 0.0
    %165 = vmatprep.subr.mxu0 0.0
    %166 = vmatpush1.msra.mxu0 0.0
    %167 = vmatprep.subr.mxu0 0.0
    %168 = vmatpush1.msra.mxu0 0.0
    %169 = vmatprep.subr.mxu0 0.0
    %170 = vmatpush1.msra.mxu0 0.0
    %171 = vmatprep.subr.mxu0 0.0
    %172 = vmatpush1.msra.mxu0 0.0
    %173 = vmatprep.subr.mxu0 0.0
    %174 = vmatpush1.msra.mxu0 %v141
    %175 = vmatprep.subr.mxu0 0.0
    %176 = vmatpush2.msra.mxu0 0.0
    %177 = vmatprep.subr.mxu0 0.0
    %178 = vmatpush2.msra.mxu0 0.0
    %179 = vmatprep.subr.mxu0 0.0
    %180 = vmatpush2.msra.mxu0 0.0
    %181 = vmatprep.subr.mxu0 0.0
    %182 = vmatpush2.msra.mxu0 0.0
    %183 = vmatprep.subr.mxu0 0.0
    %184 = vmatpush2.msra.mxu0 0.0
    %185 = vmatprep.subr.mxu0 0.0
    %186 = vmatpush2.msra.mxu0 0.0
    %187 = vmatprep.subr.mxu0 0.0
    %188 = vmatpush2.msra.mxu0 0.0
    %189 = vmatprep.subr.mxu0 0.0
    %190 = vmatpush2.msra.mxu0 0.0
    %191 = vmatprep.subr.mxu0 0.0
    %192 = vmatpush2.msra.mxu0 0.0
    %193 = vmatprep.subr.mxu0 0.0
    %194 = vmatpush2.msra.mxu0 0.0
    %195 = vmatprep.subr.mxu0 0.0
    %196 = vmatpush2.msra.mxu0 0.0
    %197 = vmatprep.subr.mxu0 0.0
    %198 = vmatpush2.msra.mxu0 0.0
    %199 = vmatprep.subr.mxu0 0.0
    %200 = vmatpush2.msra.mxu0 0.0
    %201 = vmatprep.subr.mxu0 0.0
    %202 = vmatpush2.msra.mxu0 0.0
    %203 = vmatprep.subr.mxu0 0.0
    %204 = vmatpush2.msra.mxu0 0.0
    %205 = vmatprep.subr.mxu0 0.0
    %206 = vmatpush2.msra.mxu0 0.0
    %207 = vmatprep.mubr.f32.mxu0 0.0
    %208 = vmatmul.mubr.f32.gmra.mxu0 %v138
    %v209 = vpop.f32.mrf.mxu0
    %v210 = vadd.f32 %v134, %v209
    %v211 = vpop.f32.mrf.mxu0
    %212 = vdwg.mxu0
    %214 = vset.pattern.permute.xlu0 0
    %215 = vperm.xlu0 %214, %v37
    %v216 = vpop.permute.xlu0 %215
    %v218 = vadd.f32 %v210, %v216
    %v219 = vmax.f32 %v218, 0.0
    %v220 = vld [vmem:[%s2] sm:$0xff]
    %221 = vrot.lane.b32.xlu0 %v219, 32
    %v222 = vpop.permute.xlu0 %221
    %v223 = vsel %vm43, %v222, %v219
    %224 = vrot.lane.b32.xlu0 %v223, 32
    %v225 = vpop.permute.xlu0 %224
    %v226 = vsel %vm43, %v225, %v219
    %228 = vrot.lane.b32.xlu0 %v226, 98
    %v229 = vpop.permute.xlu0 %228
    %v231 = vsel %vm51, %v229, 0.0
    %s232 = scalar_lea.vmem %s2, 8
    %v233 = vld [vmem:[%s232] sm:$0xff]
    %vm234 = vcmask 64512
    %v236 = vsel %vm234, %v233, 0
    %238 = vmatprep.subr.mxu0 0.0
    %239 = vmatpush1.msra.mxu0 0.0
    %240 = vmatprep.subr.mxu0 0.0
    %241 = vmatpush1.msra.mxu0 0.0
    %242 = vmatprep.subr.mxu0 0.0
    %243 = vmatpush1.msra.mxu0 0.0
    %244 = vmatprep.subr.mxu0 0.0
    %245 = vmatpush1.msra.mxu0 0.0
    %246 = vmatprep.subr.mxu0 0.0
    %247 = vmatpush1.msra.mxu0 0.0
    %248 = vmatprep.subr.mxu0 0.0
    %249 = vmatpush1.msra.mxu0 0.0
    %250 = vmatprep.subr.mxu0 0.0
    %251 = vmatpush1.msra.mxu0 0.0
    %252 = vmatprep.subr.mxu0 0.0
    %253 = vmatpush1.msra.mxu0 0.0
    %254 = vmatprep.subr.mxu0 0.0
    %255 = vmatpush1.msra.mxu0 0.0
    %256 = vmatprep.subr.mxu0 0.0
    %257 = vmatpush1.msra.mxu0 0.0
    %258 = vmatprep.subr.mxu0 0.0
    %259 = vmatpush1.msra.mxu0 0.0
    %260 = vmatprep.subr.mxu0 0.0
    %261 = vmatpush1.msra.mxu0 0.0
    %262 = vmatprep.subr.mxu0 0.0
    %263 = vmatpush1.msra.mxu0 0.0
    %264 = vmatprep.subr.mxu0 0.0
    %265 = vmatpush1.msra.mxu0 0.0
    %266 = vmatprep.subr.mxu0 0.0
    %267 = vmatpush1.msra.mxu0 0.0
    %268 = vmatprep.subr.mxu0 0.0
    %269 = vmatpush1.msra.mxu0 %v219
    %270 = vmatprep.subr.mxu0 0.0
    %271 = vmatpush2.msra.mxu0 0.0
    %272 = vmatprep.subr.mxu0 0.0
    %273 = vmatpush2.msra.mxu0 0.0
    %274 = vmatprep.subr.mxu0 0.0
    %275 = vmatpush2.msra.mxu0 0.0
    %276 = vmatprep.subr.mxu0 0.0
    %277 = vmatpush2.msra.mxu0 0.0
    %278 = vmatprep.subr.mxu0 0.0
    %279 = vmatpush2.msra.mxu0 0.0
    %280 = vmatprep.subr.mxu0 0.0
    %281 = vmatpush2.msra.mxu0 0.0
    %282 = vmatprep.subr.mxu0 0.0
    %283 = vmatpush2.msra.mxu0 0.0
    %284 = vmatprep.subr.mxu0 0.0
    %285 = vmatpush2.msra.mxu0 0.0
    %286 = vmatprep.subr.mxu0 0.0
    %287 = vmatpush2.msra.mxu0 0.0
    %288 = vmatprep.subr.mxu0 0.0
    %289 = vmatpush2.msra.mxu0 0.0
    %290 = vmatprep.subr.mxu0 0.0
    %291 = vmatpush2.msra.mxu0 0.0
    %292 = vmatprep.subr.mxu0 0.0
    %293 = vmatpush2.msra.mxu0 0.0
    %294 = vmatprep.subr.mxu0 0.0
    %295 = vmatpush2.msra.mxu0 0.0
    %296 = vmatprep.subr.mxu0 0.0
    %297 = vmatpush2.msra.mxu0 0.0
    %298 = vmatprep.subr.mxu0 0.0
    %299 = vmatpush2.msra.mxu0 0.0
    %300 = vmatprep.subr.mxu0 0.0
    %301 = vmatpush2.msra.mxu0 0.0
    %302 = vmatprep.mubr.f32.mxu0 0.0
    %303 = vmatmul.mubr.f32.gmra.mxu0 %v236
    %v304 = vpop.f32.mrf.mxu0
    %v305 = vadd.f32 0.0, %v304
    %v306 = vpop.f32.mrf.mxu0
    %307 = vdwg.mxu0
    %v309 = vsel %vm234, %v220, 0
    %311 = vmatprep.subr.mxu0 0.0
    %312 = vmatpush1.msra.mxu0 0.0
    %313 = vmatprep.subr.mxu0 0.0
    %314 = vmatpush1.msra.mxu0 0.0
    %315 = vmatprep.subr.mxu0 0.0
    %316 = vmatpush1.msra.mxu0 0.0
    %317 = vmatprep.subr.mxu0 0.0
    %318 = vmatpush1.msra.mxu0 0.0
    %319 = vmatprep.subr.mxu0 0.0
    %320 = vmatpush1.msra.mxu0 0.0
    %321 = vmatprep.subr.mxu0 0.0
    %322 = vmatpush1.msra.mxu0 0.0
    %323 = vmatprep.subr.mxu0 0.0
    %324 = vmatpush1.msra.mxu0 0.0
    %325 = vmatprep.subr.mxu0 0.0
    %326 = vmatpush1.msra.mxu0 0.0
    %327 = vmatprep.subr.mxu0 0.0
    %328 = vmatpush1.msra.mxu0 0.0
    %329 = vmatprep.subr.mxu0 0.0
    %330 = vmatpush1.msra.mxu0 0.0
    %331 = vmatprep.subr.mxu0 0.0
    %332 = vmatpush1.msra.mxu0 0.0
    %333 = vmatprep.subr.mxu0 0.0
    %334 = vmatpush1.msra.mxu0 0.0
    %335 = vmatprep.subr.mxu0 0.0
    %336 = vmatpush1.msra.mxu0 0.0
    %337 = vmatprep.subr.mxu0 0.0
    %338 = vmatpush1.msra.mxu0 0.0
    %339 = vmatprep.subr.mxu0 0.0
    %340 = vmatpush1.msra.mxu0 0.0
    %341 = vmatprep.subr.mxu0 0.0
    %342 = vmatpush1.msra.mxu0 %v231
    %343 = vmatprep.subr.mxu0 0.0
    %344 = vmatpush2.msra.mxu0 0.0
    %345 = vmatprep.subr.mxu0 0.0
    %346 = vmatpush2.msra.mxu0 0.0
    %347 = vmatprep.subr.mxu0 0.0
    %348 = vmatpush2.msra.mxu0 0.0
    %349 = vmatprep.subr.mxu0 0.0
    %350 = vmatpush2.msra.mxu0 0.0
    %351 = vmatprep.subr.mxu0 0.0
    %352 = vmatpush2.msra.mxu0 0.0
    %353 = vmatprep.subr.mxu0 0.0
    %354 = vmatpush2.msra.mxu0 0.0
    %355 = vmatprep.subr.mxu0 0.0
    %356 = vmatpush2.msra.mxu0 0.0
    %357 = vmatprep.subr.mxu0 0.0
    %358 = vmatpush2.msra.mxu0 0.0
    %359 = vmatprep.subr.mxu0 0.0
    %360 = vmatpush2.msra.mxu0 0.0
    %361 = vmatprep.subr.mxu0 0.0
    %362 = vmatpush2.msra.mxu0 0.0
    %363 = vmatprep.subr.mxu0 0.0
    %364 = vmatpush2.msra.mxu0 0.0
    %365 = vmatprep.subr.mxu0 0.0
    %366 = vmatpush2.msra.mxu0 0.0
    %367 = vmatprep.subr.mxu0 0.0
    %368 = vmatpush2.msra.mxu0 0.0
    %369 = vmatprep.subr.mxu0 0.0
    %370 = vmatpush2.msra.mxu0 0.0
    %371 = vmatprep.subr.mxu0 0.0
    %372 = vmatpush2.msra.mxu0 0.0
    %373 = vmatprep.subr.mxu0 0.0
    %374 = vmatpush2.msra.mxu0 0.0
    %375 = vmatprep.mubr.f32.mxu0 0.0
    %376 = vmatmul.mubr.f32.gmra.mxu0 %v309
    %v377 = vpop.f32.mrf.mxu0
    %v378 = vadd.f32 %v305, %v377
    %v379 = vpop.f32.mrf.mxu0
    %380 = vdwg.mxu0
    %382 = vset.pattern.permute.xlu0 0
    %383 = vperm.xlu0 %382, %v39
    %v384 = vpop.permute.xlu0 %383
    %v386 = vadd.f32 %v378, %v384
    %v387 = vmax.f32 %v386, 0.0
    %v388 = vld [vmem:[%s3] sm:$0xff]
    %390 = vset.pattern.permute.xlu0 0
    %391 = vperm.xlu0 %390, %v41
    %v392 = vpop.permute.xlu0 %391
    %v395 = vsel %vm59, %v388, 0
    %397 = vmatprep.subr.mxu0 0.0
    %398 = vmatpush1.msra.mxu0 0.0
    %399 = vmatprep.subr.mxu0 0.0
    %400 = vmatpush1.msra.mxu0 0.0
    %401 = vmatprep.subr.mxu0 0.0
    %402 = vmatpush1.msra.mxu0 0.0
    %403 = vmatprep.subr.mxu0 0.0
    %404 = vmatpush1.msra.mxu0 0.0
    %405 = vmatprep.subr.mxu0 0.0
    %406 = vmatpush1.msra.mxu0 0.0
    %407 = vmatprep.subr.mxu0 0.0
    %408 = vmatpush1.msra.mxu0 0.0
    %409 = vmatprep.subr.mxu0 0.0
    %410 = vmatpush1.msra.mxu0 0.0
    %411 = vmatprep.subr.mxu0 0.0
    %412 = vmatpush1.msra.mxu0 0.0
    %413 = vmatprep.subr.mxu0 0.0
    %414 = vmatpush1.msra.mxu0 0.0
    %415 = vmatprep.subr.mxu0 0.0
    %416 = vmatpush1.msra.mxu0 0.0
    %417 = vmatprep.subr.mxu0 0.0
    %418 = vmatpush1.msra.mxu0 0.0
    %419 = vmatprep.subr.mxu0 0.0
    %420 = vmatpush1.msra.mxu0 0.0
    %421 = vmatprep.subr.mxu0 0.0
    %422 = vmatpush1.msra.mxu0 0.0
    %423 = vmatprep.subr.mxu0 0.0
    %424 = vmatpush1.msra.mxu0 0.0
    %425 = vmatprep.subr.mxu0 0.0
    %426 = vmatpush1.msra.mxu0 0.0
    %427 = vmatprep.subr.mxu0 0.0
    %428 = vmatpush1.msra.mxu0 %v65
    %429 = vmatprep.subr.mxu0 0.0
    %430 = vmatpush2.msra.mxu0 0.0
    %431 = vmatprep.subr.mxu0 0.0
    %432 = vmatpush2.msra.mxu0 0.0
    %433 = vmatprep.subr.mxu0 0.0
    %434 = vmatpush2.msra.mxu0 0.0
    %435 = vmatprep.subr.mxu0 0.0
    %436 = vmatpush2.msra.mxu0 0.0
    %437 = vmatprep.subr.mxu0 0.0
    %438 = vmatpush2.msra.mxu0 0.0
    %439 = vmatprep.subr.mxu0 0.0
    %440 = vmatpush2.msra.mxu0 0.0
    %441 = vmatprep.subr.mxu0 0.0
    %442 = vmatpush2.msra.mxu0 0.0
    %443 = vmatprep.subr.mxu0 0.0
    %444 = vmatpush2.msra.mxu0 0.0
    %445 = vmatprep.subr.mxu0 0.0
    %446 = vmatpush2.msra.mxu0 0.0
    %447 = vmatprep.subr.mxu0 0.0
    %448 = vmatpush2.msra.mxu0 0.0
    %449 = vmatprep.subr.mxu0 0.0
    %450 = vmatpush2.msra.mxu0 0.0
    %451 = vmatprep.subr.mxu0 0.0
    %452 = vmatpush2.msra.mxu0 0.0
    %453 = vmatprep.subr.mxu0 0.0
    %454 = vmatpush2.msra.mxu0 0.0
    %455 = vmatprep.subr.mxu0 0.0
    %456 = vmatpush2.msra.mxu0 0.0
    %457 = vmatprep.subr.mxu0 0.0
    %458 = vmatpush2.msra.mxu0 0.0
    %459 = vmatprep.subr.mxu0 0.0
    %460 = vmatpush2.msra.mxu0 0.0
    %461 = vmatprep.mubr.f32.mxu0 0.0
    %462 = vmatmul.mubr.f32.gmra.mxu0 %v395
    %v463 = vpop.f32.mrf.mxu0
    %v464 = vadd.f32 %v392, %v463
    %v465 = vpop.f32.mrf.mxu0
    %466 = vdwg.mxu0
    %v467 = vadd.f32 %v387, %v464
    %v468 = vmax.f32 %v467, 0.0
    %vm469 = vcmask 261120
    %470 = vst.msk [vmem:[#allocation2] sm:$0xff] %vm469, %v468
    // Predicated region
    $region22: #{tpu_custom_call.1} parent=1 // pred_check
      _
    $region23: #{tpu_custom_call.1} parent=1 // pred_check_branch
      %472 = sbr.rel (0) target = $region25
    $region24: #{tpu_custom_call.1} parent=1 // pred_region
      %s474 = ssub.s32 128, 128
      %475 = vsyncadd [#allocation3], %s474
      %s477 = sshll.u32 [#allocation2], 4
      %s478 = int_to_ptr.vmem [resolvable:$true] %s477
      %480 = dma.vmem_to_hbm [thread:$0]  %s478, 128, %s5, [#allocation3]
    $region25: #{tpu_custom_call.1} parent=1 // pred_fallthru
      _
    // Predicated region
    $region26: #{tpu_custom_call.1} parent=1 // pred_check
      _
    $region27: #{tpu_custom_call.1} parent=1 // pred_check_branch
      %482 = sbr.rel (0) target = $region29
    $region28: #{tpu_custom_call.1} parent=1 // pred_region
      %483 = dma.done [#allocation3], 128
    $region29: #{tpu_custom_call.1} parent=1 // pred_fallthru
      _
    %484 = vsyncpa [#allocation3], 1

</llo_original>
